<compile_context>
chip_gen: v7x
topology: tpu7x:2x2x1
jax: 0.10.0
libtpu: 0.0.40
codegen_flags: <defaults>
</compile_context>

<pallas_src>
import jax
import jax.numpy as jnp
from jax import lax
from jax.experimental import pallas as pl
from jax.experimental.pallas import tpu as pltpu

_MAX_TILE = 1024  # rows per grid step; working set ~9 MiB, fits every gen's VMEM


def _round_up(x, m):
    return ((x + m - 1) // m) * m


def _choose_tiling(batch):
    """Pick (padded_batch, batch_tile).

    * batch <= 128 (after 8-alignment): one grid step, block == full array
      (no 128-lane constraint on the output block, no over-padding).
    * otherwise: 128-aligned tiles (the lane-dense (2, tile) output block
      requires tile % 128 == 0), sized so there are always >= 2 grid steps
      (v7x megacore) and at most 1024 rows per step; last-step row padding is
      bounded by tile - 1.
    """
    b8 = _round_up(batch, 8)
    if b8 <= 128:
        return b8, b8
    tile = min(_MAX_TILE, max(128, (b8 // 256) * 128))
    return _round_up(b8, tile), tile


def _critic_kernel(sa_ref, w14_ref, b14_ref, w2_ref, b2_ref, w5_ref, b5_ref,
                   w36_ref, b36_ref, out_ref):
    """Twin 3-layer MLP on one batch tile.

    out_ref is a lane-dense [2, tile] block: row 0 = q1, row 1 = q2.
    """
    hidden = w2_ref.shape[0]

    sa = sa_ref[...]                                               # [tile, K] bf16

    # Fused first layer of both heads: one K=128 MXU pass, f32 accumulation.
    h = jnp.dot(sa, w14_ref[...], preferred_element_type=jnp.float32)
    # bias + ReLU, then a single cast to bf16 feeding the second-layer matmuls.
    h = jnp.maximum(h + b14_ref[...], 0.0).astype(jnp.bfloat16)    # [tile, 2H]

    h1 = h[:, :hidden]
    h2 = h[:, hidden:]

    g1 = jnp.maximum(
        jnp.dot(h1, w2_ref[...], preferred_element_type=jnp.float32) + b2_ref[...],
        0.0)
    g2 = jnp.maximum(
        jnp.dot(h2, w5_ref[...], preferred_element_type=jnp.float32) + b5_ref[...],
        0.0)

    # Final 256 -> 1 projections: one tiny MXU matmul (M=2, K=2H, N=tile)
    # against the block-diagonal [2, 2H] weight -> lane-dense [2, tile] result,
    # stored as a single full-lane write.
    g = jnp.concatenate([g1, g2], axis=-1).astype(jnp.bfloat16)    # [tile, 2H]
    q = lax.dot_general(w36_ref[...], g, (((1,), (1,)), ((), ())),
                        preferred_element_type=jnp.float32)        # [2, tile]
    out_ref[...] = q + b36_ref[...]


def init_critic_params(key, state_dim, action_dim, hidden_dim=(256, 256)):
    """Deterministic init mimicking nn.Linear defaults (uniform +/- 1/sqrt(fan_in))."""
    layer_dims = [
        (state_dim + action_dim, hidden_dim[0]),   # l1
        (hidden_dim[0], hidden_dim[1]),            # l2
        (hidden_dim[1], 1),                        # l3
        (state_dim + action_dim, hidden_dim[0]),   # l4
        (hidden_dim[0], hidden_dim[1]),            # l5
        (hidden_dim[1], 1),                        # l6
    ]
    params = []
    for fan_in, fan_out in layer_dims:
        key, kw, kb = jax.random.split(key, 3)
        bound = 1.0 / float(fan_in) ** 0.5
        w = jax.random.uniform(kw, (fan_in, fan_out), jnp.float32, -bound, bound)
        b = jax.random.uniform(kb, (1, fan_out), jnp.float32, -bound, bound)
        params += [w, b]
    return tuple(params)


def pack_critic_params(params, state_dim, action_dim):
    """One-time fuse / pad / cast of raw [in, out]-layout params for the kernel."""
    (w1, b1, w2, b2, w3, b3, w4, b4, w5, b5, w6, b6) = params
    d = state_dim + action_dim
    k = _round_up(max(d, 128), 128)                  # padded contraction dim
    h = w2.shape[0]

    # Fused, zero-padded first layer of both heads: [K, 2H] bf16.
    w14 = jnp.concatenate([w1, w4], axis=1)
    w14 = jnp.pad(w14, ((0, k - d), (0, 0))).astype(jnp.bfloat16)
    b14 = jnp.concatenate([b1, b4], axis=1).astype(jnp.float32)          # [1, 2H]

    # Block-diagonal final projection so q1/q2 come out of one MXU matmul as a
    # lane-dense [2, tile] result: [2, 2H] bf16.
    zero = jnp.zeros((1, h), jnp.float32)
    w36 = jnp.concatenate(
        [jnp.concatenate([w3.T, zero], axis=1),
         jnp.concatenate([zero, w6.T], axis=1)], axis=0).astype(jnp.bfloat16)
    b36 = jnp.concatenate([b3, b6], axis=1).T.astype(jnp.float32)        # [2, 1]

    return (w14, b14, w2.astype(jnp.bfloat16), b2.astype(jnp.float32),
            w5.astype(jnp.bfloat16), b5.astype(jnp.float32), w36, b36)


@jax.jit
def critic_forward(state, action, packed):
    """Returns (q1, q2), each shape [batch] f32, matching Critic.forward."""
    (w14, b14, w2, b2, w5, b5, w36, b36) = packed
    k, two_h = w14.shape
    hidden = two_h // 2

    batch = state.shape[0]
    d = state.shape[1] + action.shape[1]
    bp, tile = _choose_tiling(batch)

    # Pre-concat state||action, cast to bf16, zero-pad features to K (>=128)
    # and rows to the padded batch: one contiguous, lane-aligned input DMA per
    # tile and a single K=128 first-layer MXU pass.
    sa = jnp.concatenate(
        [state.astype(jnp.bfloat16), action.astype(jnp.bfloat16)], axis=-1)
    sa = jnp.pad(sa, ((0, bp - batch), (0, k - d)))

    def const_spec(shape):
        # Constant index_map: each parameter is fetched once and stays
        # VMEM-resident across the whole grid.
        return pl.BlockSpec(shape, lambda i: (0, 0))

    grid = (bp // tile,)
    in_specs = [
        pl.BlockSpec((tile, k), lambda i: (i, 0)),
        const_spec(w14.shape), const_spec(b14.shape),
        const_spec(w2.shape), const_spec(b2.shape),
        const_spec(w5.shape), const_spec(b5.shape),
        const_spec(w36.shape), const_spec(b36.shape),
    ]
    out_spec = pl.BlockSpec((2, tile), lambda i: (0, i))
    out_shape = jax.ShapeDtypeStruct((2, bp), jnp.float32)

    weight_bytes = (2 * (w14.size + w2.size + w5.size + w36.size)
                    + 4 * (b14.size + b2.size + b5.size + b36.size))
    cost = pl.CostEstimate(
        flops=2 * bp * (k * two_h + 2 * hidden * hidden + 2 * two_h),
        transcendentals=0,
        bytes_accessed=bp * k * 2 + bp * 2 * 4 + weight_bytes,
    )

    q12 = pl.pallas_call(
        _critic_kernel,
        grid=grid,
        in_specs=in_specs,
        out_specs=out_spec,
        out_shape=out_shape,
        compiler_params=pltpu.CompilerParams(
            dimension_semantics=("parallel",),
            vmem_limit_bytes=32 * 1024 * 1024,
        ),
        cost_estimate=cost,
    )(sa, w14, b14, w2, b2, w5, b5, w36, b36)

    # Padded batch rows carry ReLU(bias) junk; slice them off here and never
    # consume the padded tail elsewhere.
    return q12[0, :batch], q12[1, :batch]


def _critic_reference(state, action, params):
    sa = jnp.concatenate([state, action], axis=-1).astype(jnp.float32)
    (w1, b1, w2, b2, w3, b3, w4, b4, w5, b5, w6, b6) = params

    def head(wa, ba, wb, bb, wc, bc):
        h = jnp.maximum(sa @ wa + ba, 0.0)
        h = jnp.maximum(h @ wb + bb, 0.0)
        return (h @ wc + bc)[:, 0]

    return (head(w1, b1, w2, b2, w3, b3), head(w4, b4, w5, b5, w6, b6))


if __name__ == "__main__":
    state_dim, action_dim = 17, 6

    key = jax.random.PRNGKey(0)
    kp, _ = jax.random.split(key)
    params = init_critic_params(kp, state_dim, action_dim, hidden_dim=(256, 256))
    packed = pack_critic_params(params, state_dim, action_dim)

    # batch=5: tiny-batch single-program path (block == full array).
    # batch=300: multi-program grid with balanced 128-row tiles (bp=384, 3 steps).
    # batch=1024: two 512-row tiles, zero padding (v7x gets one tile per TC).
    for batch in (5, 300, 1024):
        kb = jax.random.fold_in(key, batch)
        k_s, k_a = jax.random.split(kb)
        state = jax.random.normal(k_s, (batch, state_dim), jnp.float32)
        action = jax.random.normal(k_a, (batch, action_dim), jnp.float32)

        q1, q2 = critic_forward(state, action, packed)
        q1 = jax.block_until_ready(q1)
        q2 = jax.block_until_ready(q2)

        r1, r2 = _critic_reference(state, action, params)
        assert q1.shape == (batch,) and q2.shape == (batch,)
        # bf16 matmul operands (f32 accumulation) -> slightly looser tolerance
        # against the pure-f32 reference.
        assert jnp.allclose(q1, r1, atol=3e-2, rtol=3e-2), float(jnp.max(jnp.abs(q1 - r1)))
        assert jnp.allclose(q2, r2, atol=3e-2, rtol=3e-2), float(jnp.max(jnp.abs(q2 - r2)))

    print("KERNEL_OK")
</pallas_src>

<mosaic_0001>
module attributes {stable_mosaic.version = 11 : i64} {
  func.func @_critic_kernel(%arg0: i32, %arg1: memref<8x128xbf16, #tpu.memory_space<vmem>>, %arg2: memref<128x512xbf16, #tpu.memory_space<vmem>>, %arg3: memref<1x512xf32, #tpu.memory_space<vmem>>, %arg4: memref<256x256xbf16, #tpu.memory_space<vmem>>, %arg5: memref<1x256xf32, #tpu.memory_space<vmem>>, %arg6: memref<256x256xbf16, #tpu.memory_space<vmem>>, %arg7: memref<1x256xf32, #tpu.memory_space<vmem>>, %arg8: memref<2x512xbf16, #tpu.memory_space<vmem>>, %arg9: memref<2x1xf32, #tpu.memory_space<vmem>>, %arg10: memref<2x8xf32, #tpu.memory_space<vmem>>) attributes {dimension_semantics = [#tpu.dimension_semantics<parallel>], iteration_bounds = array<i64: 1>, scalar_prefetch = 0 : i64, scratch_operands = 0 : i64, tpu.core_type = #tpu.core_type<tc>, window_params = [{transform_indices = @transform_0, window_bounds = array<i64: 8, 128>}, {pipeline_mode = #tpu.pipeline_mode<synchronous>, transform_indices = @transform_1, window_bounds = array<i64: 128, 512>}, {pipeline_mode = #tpu.pipeline_mode<synchronous>, transform_indices = @transform_2, window_bounds = array<i64: 1, 512>}, {pipeline_mode = #tpu.pipeline_mode<synchronous>, transform_indices = @transform_3, window_bounds = array<i64: 256, 256>}, {pipeline_mode = #tpu.pipeline_mode<synchronous>, transform_indices = @transform_4, window_bounds = array<i64: 1, 256>}, {pipeline_mode = #tpu.pipeline_mode<synchronous>, transform_indices = @transform_5, window_bounds = array<i64: 256, 256>}, {pipeline_mode = #tpu.pipeline_mode<synchronous>, transform_indices = @transform_6, window_bounds = array<i64: 1, 256>}, {pipeline_mode = #tpu.pipeline_mode<synchronous>, transform_indices = @transform_7, window_bounds = array<i64: 2, 512>}, {pipeline_mode = #tpu.pipeline_mode<synchronous>, transform_indices = @transform_8, window_bounds = array<i64: 2, 1>}, {transform_indices = @transform_9, window_bounds = array<i64: 2, 8>}]} {
    %c0 = arith.constant 0 : index
    %c0_0 = arith.constant 0 : index
    %0 = vector.load %arg1[%c0, %c0_0] : memref<8x128xbf16, #tpu.memory_space<vmem>>, vector<8x128xbf16>
    %c0_1 = arith.constant 0 : index
    %c0_2 = arith.constant 0 : index
    %1 = vector.load %arg2[%c0_1, %c0_2] : memref<128x512xbf16, #tpu.memory_space<vmem>>, vector<128x512xbf16>
    %cst = arith.constant dense<0.000000e+00> : vector<8x512xf32>
    %2 = tpu.matmul %0, %1, %cst {dimension_numbers = #tpu.dot_dimension_numbers<[1], [0], [0], [1], [0, 0, 1, 1], [], []>} : vector<8x128xbf16>, vector<128x512xbf16>, vector<8x512xf32> -> vector<8x512xf32>
    %c0_3 = arith.constant 0 : index
    %c0_4 = arith.constant 0 : index
    %3 = vector.load %arg3[%c0_3, %c0_4] : memref<1x512xf32, #tpu.memory_space<vmem>>, vector<1x512xf32>
    %4 = vector.broadcast %3 : vector<1x512xf32> to vector<8x512xf32>
    %5 = arith.addf %2, %4 : vector<8x512xf32>
    %cst_5 = arith.constant 0.000000e+00 : f32
    %6 = vector.broadcast %cst_5 : f32 to vector<8x512xf32>
    %7 = arith.maximumf %5, %6 : vector<8x512xf32>
    %8 = arith.truncf %7 : vector<8x512xf32> to vector<8x512xbf16>
    %9 = vector.extract_strided_slice %8 {offsets = [0, 0], sizes = [8, 256], strides = [1, 1]} : vector<8x512xbf16> to vector<8x256xbf16>
    %10 = vector.extract_strided_slice %8 {offsets = [0, 256], sizes = [8, 256], strides = [1, 1]} : vector<8x512xbf16> to vector<8x256xbf16>
    %c0_6 = arith.constant 0 : index
    %c0_7 = arith.constant 0 : index
    %11 = vector.load %arg4[%c0_6, %c0_7] : memref<256x256xbf16, #tpu.memory_space<vmem>>, vector<256x256xbf16>
    %cst_8 = arith.constant dense<0.000000e+00> : vector<8x256xf32>
    %12 = tpu.matmul %9, %11, %cst_8 {dimension_numbers = #tpu.dot_dimension_numbers<[1], [0], [0], [1], [0, 0, 1, 1], [], []>} : vector<8x256xbf16>, vector<256x256xbf16>, vector<8x256xf32> -> vector<8x256xf32>
    %c0_9 = arith.constant 0 : index
    %c0_10 = arith.constant 0 : index
    %13 = vector.load %arg5[%c0_9, %c0_10] : memref<1x256xf32, #tpu.memory_space<vmem>>, vector<1x256xf32>
    %14 = vector.broadcast %13 : vector<1x256xf32> to vector<8x256xf32>
    %15 = arith.addf %12, %14 : vector<8x256xf32>
    %cst_11 = arith.constant 0.000000e+00 : f32
    %16 = vector.broadcast %cst_11 : f32 to vector<8x256xf32>
    %17 = arith.maximumf %15, %16 : vector<8x256xf32>
    %c0_12 = arith.constant 0 : index
    %c0_13 = arith.constant 0 : index
    %18 = vector.load %arg6[%c0_12, %c0_13] : memref<256x256xbf16, #tpu.memory_space<vmem>>, vector<256x256xbf16>
    %cst_14 = arith.constant dense<0.000000e+00> : vector<8x256xf32>
    %19 = tpu.matmul %10, %18, %cst_14 {dimension_numbers = #tpu.dot_dimension_numbers<[1], [0], [0], [1], [0, 0, 1, 1], [], []>} : vector<8x256xbf16>, vector<256x256xbf16>, vector<8x256xf32> -> vector<8x256xf32>
    %c0_15 = arith.constant 0 : index
    %c0_16 = arith.constant 0 : index
    %20 = vector.load %arg7[%c0_15, %c0_16] : memref<1x256xf32, #tpu.memory_space<vmem>>, vector<1x256xf32>
    %21 = vector.broadcast %20 : vector<1x256xf32> to vector<8x256xf32>
    %22 = arith.addf %19, %21 : vector<8x256xf32>
    %cst_17 = arith.constant 0.000000e+00 : f32
    %23 = vector.broadcast %cst_17 : f32 to vector<8x256xf32>
    %24 = arith.maximumf %22, %23 : vector<8x256xf32>
    %25 = tpu.concatenate %17, %24 in 1 : vector<8x256xf32>, vector<8x256xf32> -> vector<8x512xf32>
    %26 = arith.truncf %25 : vector<8x512xf32> to vector<8x512xbf16>
    %c0_18 = arith.constant 0 : index
    %c0_19 = arith.constant 0 : index
    %27 = vector.load %arg8[%c0_18, %c0_19] : memref<2x512xbf16, #tpu.memory_space<vmem>>, vector<2x512xbf16>
    %cst_20 = arith.constant dense<0.000000e+00> : vector<2x8xf32>
    %28 = tpu.matmul %27, %26, %cst_20 {dimension_numbers = #tpu.dot_dimension_numbers<[1], [1], [0], [0], [0, 0, 1, 0], [], []>} : vector<2x512xbf16>, vector<8x512xbf16>, vector<2x8xf32> -> vector<2x8xf32>
    %c0_21 = arith.constant 0 : index
    %c0_22 = arith.constant 0 : index
    %29 = vector.load %arg9[%c0_21, %c0_22] : memref<2x1xf32, #tpu.memory_space<vmem>>, vector<2x1xf32>
    %30 = vector.broadcast %29 : vector<2x1xf32> to vector<2x8xf32>
    %31 = arith.addf %28, %30 : vector<2x8xf32>
    %c0_23 = arith.constant 0 : index
    %c0_24 = arith.constant 0 : index
    %32 = vector.load %arg10[%c0_23, %c0_24] : memref<2x8xf32, #tpu.memory_space<vmem>>, vector<2x8xf32>
    tpu.vector_store %arg10[%c0_23, %c0_24], %31 {strides = array<i32>} : memref<2x8xf32, #tpu.memory_space<vmem>>, vector<2x8xf32>,
    return
  }
  func.func @transform_0(%arg0: i32) -> (i32, i32) {
    %c0_i32 = arith.constant 0 : i32
    %c0_i32_0 = arith.constant 0 : i32
    return %arg0, %c0_i32 : i32, i32
  }
  func.func @transform_1(%arg0: i32) -> (i32, i32) {
    %c0_i32 = arith.constant 0 : i32
    %c0_i32_0 = arith.constant 0 : i32
    %c0_i32_1 = arith.constant 0 : i32
    return %c0_i32, %c0_i32_0 : i32, i32
  }
  func.func @transform_2(%arg0: i32) -> (i32, i32) {
    %c0_i32 = arith.constant 0 : i32
    %c0_i32_0 = arith.constant 0 : i32
    %c0_i32_1 = arith.constant 0 : i32
    return %c0_i32, %c0_i32_0 : i32, i32
  }
  func.func @transform_3(%arg0: i32) -> (i32, i32) {
    %c0_i32 = arith.constant 0 : i32
    %c0_i32_0 = arith.constant 0 : i32
    %c0_i32_1 = arith.constant 0 : i32
    return %c0_i32, %c0_i32_0 : i32, i32
  }
  func.func @transform_4(%arg0: i32) -> (i32, i32) {
    %c0_i32 = arith.constant 0 : i32
    %c0_i32_0 = arith.constant 0 : i32
    %c0_i32_1 = arith.constant 0 : i32
    return %c0_i32, %c0_i32_0 : i32, i32
  }
  func.func @transform_5(%arg0: i32) -> (i32, i32) {
    %c0_i32 = arith.constant 0 : i32
    %c0_i32_0 = arith.constant 0 : i32
    %c0_i32_1 = arith.constant 0 : i32
    return %c0_i32, %c0_i32_0 : i32, i32
  }
  func.func @transform_6(%arg0: i32) -> (i32, i32) {
    %c0_i32 = arith.constant 0 : i32
    %c0_i32_0 = arith.constant 0 : i32
    %c0_i32_1 = arith.constant 0 : i32
    return %c0_i32, %c0_i32_0 : i32, i32
  }
  func.func @transform_7(%arg0: i32) -> (i32, i32) {
    %c0_i32 = arith.constant 0 : i32
    %c0_i32_0 = arith.constant 0 : i32
    %c0_i32_1 = arith.constant 0 : i32
    return %c0_i32, %c0_i32_0 : i32, i32
  }
  func.func @transform_8(%arg0: i32) -> (i32, i32) {
    %c0_i32 = arith.constant 0 : i32
    %c0_i32_0 = arith.constant 0 : i32
    %c0_i32_1 = arith.constant 0 : i32
    return %c0_i32, %c0_i32_0 : i32, i32
  }
  func.func @transform_9(%arg0: i32) -> (i32, i32) {
    %c0_i32 = arith.constant 0 : i32
    %c0_i32_0 = arith.constant 0 : i32
    return %c0_i32, %arg0 : i32, i32
  }
}

</mosaic_0001>

<llo_original>
// kernel: critic_forward.1
$region0: #{critic_forward.1}
  #allocation0 [shape = 'u32[]', space=smem, size = 0x4, offset = 0x4, fixed_abs, tag = 'smem constant byte address 0x4 - core index']
  #allocation1 [shape = 'u32[144,128]{1,0:T(1,128)}', space=vmem, size = 0x12000, scoped, tag = 'internal scratch']
  %s0 = inlined_call_operand.vmem [shape: bf16[8,128], index: 0, kind: input, shape index: {}]
  %s1 = inlined_call_operand.hbm [shape: bf16[128,512], index: 1, kind: input, shape index: {}]
  %s2 = inlined_call_operand.vmem [shape: f32[1,512], index: 2, kind: input, shape index: {}]
  %s3 = inlined_call_operand.hbm [shape: bf16[256,256], index: 3, kind: input, shape index: {}]
  %s4 = inlined_call_operand.vmem [shape: f32[1,256], index: 4, kind: input, shape index: {}]
  %s5 = inlined_call_operand.hbm [shape: bf16[256,256], index: 5, kind: input, shape index: {}]
  %s6 = inlined_call_operand.vmem [shape: f32[1,256], index: 6, kind: input, shape index: {}]
  %s7 = inlined_call_operand.vmem [shape: bf16[2,512], index: 7, kind: input, shape index: {}]
  %s8 = inlined_call_operand.vmem [shape: f32[2,1], index: 8, kind: input, shape index: {}]
  %s9 = inlined_call_operand.vmem [shape: f32[2,8], index: 9, kind: output, shape index: {}]
  %s10 = sld [smem:[#allocation0]]
  $region58: #{critic_forward.1} parent=0
    _
  %s12 = ssub.s32 1, %s10
  %s13 = scalar_select 0, %s12, %s10
  $region1: #{critic_forward.1} parent=0
    #allocation2 [shape = 'u8[131072]{0}', space=vmem, size = 0x20000, scoped, tag = 'input window, operand 1, single buffered']
    #allocation3 [shape = 's32[1]{0}', space=sflag, size = 0x4, scoped, tag = 'scoped memory for critic_forward.1']
    #allocation4 [shape = 'u8[131072]{0}', space=vmem, size = 0x20000, scoped, tag = 'input window, operand 3, single buffered']
    #allocation5 [shape = 's32[1]{0}', space=sflag, size = 0x4, scoped, tag = 'scoped memory for critic_forward.1']
    #allocation6 [shape = 'u8[131072]{0}', space=vmem, size = 0x20000, scoped, tag = 'input window, operand 5, single buffered']
    %14 = vsyncpa [#allocation3], 0
    %15 = vsyncpa [#allocation5], 0
    // Predicated region
    $region2: #{critic_forward.1} parent=1 // pred_check
      _
    $region3: #{critic_forward.1} parent=1 // pred_check_branch
      %17 = sbr.rel (0) target = $region5
    $region4: #{critic_forward.1} parent=1 // pred_region
      _
    $region5: #{critic_forward.1} parent=1 // pred_fallthru
      _
    // Predicated region
    $region6: #{critic_forward.1} parent=1 // pred_check
      _
    $region7: #{critic_forward.1} parent=1 // pred_check_branch
      %19 = sbr.rel (0) target = $region9
    $region8: #{critic_forward.1} parent=1 // pred_region
      %s21 = ssub.s32 4096, 4096
      %22 = vsyncadd [#allocation3], %s21
      %s23 = sshll.u32 [#allocation2], 4
      %s24 = int_to_ptr.vmem [resolvable:$true] %s23
      %29 = dma.hbm_to_vmem [thread:$0]  %s1, 4096, %s24, [#allocation3], 256, 256, 16
    $region9: #{critic_forward.1} parent=1 // pred_fallthru
      _
    // Predicated region
    $region10: #{critic_forward.1} parent=1 // pred_check
      _
    $region11: #{critic_forward.1} parent=1 // pred_check_branch
      %31 = sbr.rel (0) target = $region13
    $region12: #{critic_forward.1} parent=1 // pred_region
      _
    $region13: #{critic_forward.1} parent=1 // pred_fallthru
      _
    // Predicated region
    $region14: #{critic_forward.1} parent=1 // pred_check
      _
    $region15: #{critic_forward.1} parent=1 // pred_check_branch
      %33 = sbr.rel (0) target = $region17
    $region16: #{critic_forward.1} parent=1 // pred_region
      %s35 = ssub.s32 4096, 4096
      %36 = vsyncadd [#allocation5], %s35
      %s37 = sshll.u32 [#allocation4], 4
      %s38 = int_to_ptr.vmem [resolvable:$true] %s37
      %43 = dma.hbm_to_vmem [thread:$0]  %s3, 4096, %s38, [#allocation5], 128, 128, 8
    $region17: #{critic_forward.1} parent=1 // pred_fallthru
      _
    // Predicated region
    $region18: #{critic_forward.1} parent=1 // pred_check
      _
    $region19: #{critic_forward.1} parent=1 // pred_check_branch
      %45 = sbr.rel (0) target = $region21
    $region20: #{critic_forward.1} parent=1 // pred_region
      _
    $region21: #{critic_forward.1} parent=1 // pred_fallthru
      _
    // Predicated region
    $region22: #{critic_forward.1} parent=1 // pred_check
      _
    $region23: #{critic_forward.1} parent=1 // pred_check_branch
      %47 = sbr.rel (0) target = $region25
    $region24: #{critic_forward.1} parent=1 // pred_region
      %s49 = ssub.s32 4096, 4096
      %50 = vsyncadd [#allocation5], %s49
      %s51 = sshll.u32 [#allocation6], 4
      %s52 = int_to_ptr.vmem [resolvable:$true] %s51
      %57 = dma.hbm_to_vmem [thread:$0]  %s5, 4096, %s52, [#allocation5], 128, 128, 8
    $region25: #{critic_forward.1} parent=1 // pred_fallthru
      _
    // Predicated region
    $region26: #{critic_forward.1} parent=1 // pred_check
      _
    $region27: #{critic_forward.1} parent=1 // pred_check_branch
      %59 = sbr.rel (0) target = $region29
    $region28: #{critic_forward.1} parent=1 // pred_region
      _
    $region29: #{critic_forward.1} parent=1 // pred_fallthru
      _
    // Predicated region
    $region30: #{critic_forward.1} parent=1 // pred_check
      _
    $region31: #{critic_forward.1} parent=1 // pred_check_branch
      %61 = sbr.rel (0) target = $region33
    $region32: #{critic_forward.1} parent=1 // pred_region
      _
    $region33: #{critic_forward.1} parent=1 // pred_fallthru
      _
    // Predicated region
    $region34: #{critic_forward.1} parent=1 // pred_check
      _
    $region35: #{critic_forward.1} parent=1 // pred_check_branch
      %63 = sbr.rel (0) target = $region37
    $region36: #{critic_forward.1} parent=1 // pred_region
      _
    $region37: #{critic_forward.1} parent=1 // pred_fallthru
      _
    // Predicated region
    $region38: #{critic_forward.1} parent=1 // pred_check
      _
    $region39: #{critic_forward.1} parent=1 // pred_check_branch
      %65 = sbr.rel (0) target = $region41
    $region40: #{critic_forward.1} parent=1 // pred_region
      %66 = dma.done [#allocation3], 4096
    $region41: #{critic_forward.1} parent=1 // pred_fallthru
      _
    // Predicated region
    $region42: #{critic_forward.1} parent=1 // pred_check
      _
    $region43: #{critic_forward.1} parent=1 // pred_check_branch
      %68 = sbr.rel (0) target = $region45
    $region44: #{critic_forward.1} parent=1 // pred_region
      %69 = dma.done [#allocation5], 4096
    $region45: #{critic_forward.1} parent=1 // pred_fallthru
      _
    // Predicated region
    $region46: #{critic_forward.1} parent=1 // pred_check
      _
    $region47: #{critic_forward.1} parent=1 // pred_check_branch
      %71 = sbr.rel (0) target = $region49
    $region48: #{critic_forward.1} parent=1 // pred_region
      %72 = dma.done [#allocation5], 4096
    $region49: #{critic_forward.1} parent=1 // pred_fallthru
      _
    %v74 = vld [vmem:[%s0] sm:$0xf]
    %v75 = vld [vmem:[#allocation2] sm:$0xff]
    %v76 = vld [vmem:[#allocation2 + $0x8] sm:$0xff]
    %v77 = vld [vmem:[#allocation2 + $0x10] sm:$0xff]
    %v78 = vld [vmem:[#allocation2 + $0x18] sm:$0xff]
    %v79 = vld [vmem:[#allocation2 + $0x20] sm:$0xff]
    %v80 = vld [vmem:[#allocation2 + $0x28] sm:$0xff]
    %v81 = vld [vmem:[#allocation2 + $0x30] sm:$0xff]
    %v82 = vld [vmem:[#allocation2 + $0x38] sm:$0xff]
    %v83 = vld [vmem:[#allocation2 + $0x40] sm:$0xff]
    %v84 = vld [vmem:[#allocation2 + $0x48] sm:$0xff]
    %v85 = vld [vmem:[#allocation2 + $0x50] sm:$0xff]
    %v86 = vld [vmem:[#allocation2 + $0x58] sm:$0xff]
    %v87 = vld [vmem:[#allocation2 + $0x60] sm:$0xff]
    %v88 = vld [vmem:[#allocation2 + $0x68] sm:$0xff]
    %v89 = vld [vmem:[#allocation2 + $0x70] sm:$0xff]
    %v90 = vld [vmem:[#allocation2 + $0x78] sm:$0xff]
    %v91 = vld [vmem:[#allocation2 + $0x80] sm:$0xff]
    %v92 = vld [vmem:[#allocation2 + $0x88] sm:$0xff]
    %v93 = vld [vmem:[#allocation2 + $0x90] sm:$0xff]
    %v94 = vld [vmem:[#allocation2 + $0x98] sm:$0xff]
    %v95 = vld [vmem:[#allocation2 + $0xa0] sm:$0xff]
    %v96 = vld [vmem:[#allocation2 + $0xa8] sm:$0xff]
    %v97 = vld [vmem:[#allocation2 + $0xb0] sm:$0xff]
    %v98 = vld [vmem:[#allocation2 + $0xb8] sm:$0xff]
    %v99 = vld [vmem:[#allocation2 + $0xc0] sm:$0xff]
    %v100 = vld [vmem:[#allocation2 + $0xc8] sm:$0xff]
    %v101 = vld [vmem:[#allocation2 + $0xd0] sm:$0xff]
    %v102 = vld [vmem:[#allocation2 + $0xd8] sm:$0xff]
    %v103 = vld [vmem:[#allocation2 + $0xe0] sm:$0xff]
    %v104 = vld [vmem:[#allocation2 + $0xe8] sm:$0xff]
    %v105 = vld [vmem:[#allocation2 + $0xf0] sm:$0xff]
    %v106 = vld [vmem:[#allocation2 + $0xf8] sm:$0xff]
    %v107 = vld [vmem:[%s2] sm:$0xf]
    %v109 = vlaneseq
    %v110 = vshrl.u32 %v109, 7
    %v111 = vsub.s32 0, %v110
    %v112 = vrot.slane %v107, %v111
    %v113 = vlaneseq
    %v114 = vshrl.u32 %v113, 7
    %v115 = vsub.s32 1, %v114
    %v116 = vrot.slane %v107, %v115
    %v117 = vlaneseq
    %v118 = vshrl.u32 %v117, 7
    %v119 = vsub.s32 2, %v118
    %v120 = vrot.slane %v107, %v119
    %v121 = vlaneseq
    %v122 = vshrl.u32 %v121, 7
    %v123 = vsub.s32 3, %v122
    %v124 = vrot.slane %v107, %v123
    %v161 = vunpack.c.l.b16 %v75
    %v162 = vunpack.c.h.b16 %v75
    %v163 = vunpack.c.l.b16 %v76
    %v164 = vunpack.c.h.b16 %v76
    %v165 = vunpack.c.l.b16 %v77
    %v166 = vunpack.c.h.b16 %v77
    %v167 = vunpack.c.l.b16 %v78
    %v168 = vunpack.c.h.b16 %v78
    %v169 = vunpack.c.l.b16 %v79
    %v170 = vunpack.c.h.b16 %v79
    %v171 = vunpack.c.l.b16 %v80
    %v172 = vunpack.c.h.b16 %v80
    %v173 = vunpack.c.l.b16 %v81
    %v174 = vunpack.c.h.b16 %v81
    %v175 = vunpack.c.l.b16 %v82
    %v176 = vunpack.c.h.b16 %v82
    %v177 = vunpack.c.l.b16 %v83
    %v178 = vunpack.c.h.b16 %v83
    %v179 = vunpack.c.l.b16 %v84
    %v180 = vunpack.c.h.b16 %v84
    %v181 = vunpack.c.l.b16 %v85
    %v182 = vunpack.c.h.b16 %v85
    %v183 = vunpack.c.l.b16 %v86
    %v184 = vunpack.c.h.b16 %v86
    %v185 = vunpack.c.l.b16 %v87
    %v186 = vunpack.c.h.b16 %v87
    %v187 = vunpack.c.l.b16 %v88
    %v188 = vunpack.c.h.b16 %v88
    %v189 = vunpack.c.l.b16 %v89
    %v190 = vunpack.c.h.b16 %v89
    %v191 = vunpack.c.l.b16 %v90
    %v192 = vunpack.c.h.b16 %v90
    %v193 = vunpack.c.l.b16 %v91
    %v194 = vunpack.c.h.b16 %v91
    %v195 = vunpack.c.l.b16 %v92
    %v196 = vunpack.c.h.b16 %v92
    %v197 = vunpack.c.l.b16 %v93
    %v198 = vunpack.c.h.b16 %v93
    %v199 = vunpack.c.l.b16 %v94
    %v200 = vunpack.c.h.b16 %v94
    %v201 = vunpack.c.l.b16 %v95
    %v202 = vunpack.c.h.b16 %v95
    %v203 = vunpack.c.l.b16 %v96
    %v204 = vunpack.c.h.b16 %v96
    %v205 = vunpack.c.l.b16 %v97
    %v206 = vunpack.c.h.b16 %v97
    %v207 = vunpack.c.l.b16 %v98
    %v208 = vunpack.c.h.b16 %v98
    %v209 = vunpack.c.l.b16 %v99
    %v210 = vunpack.c.h.b16 %v99
    %v211 = vunpack.c.l.b16 %v100
    %v212 = vunpack.c.h.b16 %v100
    %v213 = vunpack.c.l.b16 %v101
    %v214 = vunpack.c.h.b16 %v101
    %v215 = vunpack.c.l.b16 %v102
    %v216 = vunpack.c.h.b16 %v102
    %v217 = vunpack.c.l.b16 %v103
    %v218 = vunpack.c.h.b16 %v103
    %v219 = vunpack.c.l.b16 %v104
    %v220 = vunpack.c.h.b16 %v104
    %v221 = vunpack.c.l.b16 %v105
    %v222 = vunpack.c.h.b16 %v105
    %v223 = vunpack.c.l.b16 %v106
    %v224 = vunpack.c.h.b16 %v106
    %v225 = vpack.c.b16 %v165, %v161
    %v226 = vpack.c.b16 %v166, %v162
    %v227 = vpack.c.b16 %v167, %v163
    %v228 = vpack.c.b16 %v168, %v164
    %v229 = vpack.c.b16 %v173, %v169
    %v230 = vpack.c.b16 %v174, %v170
    %v231 = vpack.c.b16 %v175, %v171
    %v232 = vpack.c.b16 %v176, %v172
    %v233 = vpack.c.b16 %v181, %v177
    %v234 = vpack.c.b16 %v182, %v178
    %v235 = vpack.c.b16 %v183, %v179
    %v236 = vpack.c.b16 %v184, %v180
    %v237 = vpack.c.b16 %v189, %v185
    %v238 = vpack.c.b16 %v190, %v186
    %v239 = vpack.c.b16 %v191, %v187
    %v240 = vpack.c.b16 %v192, %v188
    %v241 = vpack.c.b16 %v197, %v193
    %v242 = vpack.c.b16 %v198, %v194
    %v243 = vpack.c.b16 %v199, %v195
    %v244 = vpack.c.b16 %v200, %v196
    %v245 = vpack.c.b16 %v205, %v201
    %v246 = vpack.c.b16 %v206, %v202
    %v247 = vpack.c.b16 %v207, %v203
    %v248 = vpack.c.b16 %v208, %v204
    %v249 = vpack.c.b16 %v213, %v209
    %v250 = vpack.c.b16 %v214, %v210
    %v251 = vpack.c.b16 %v215, %v211
    %v252 = vpack.c.b16 %v216, %v212
    %v253 = vpack.c.b16 %v221, %v217
    %v254 = vpack.c.b16 %v222, %v218
    %v255 = vpack.c.b16 %v223, %v219
    %v256 = vpack.c.b16 %v224, %v220
    %289 = vmatprep.subr.bf16.mxu0 %v226
    %290 = vmatpush1.bf16.msra.mxu0 %v225
    %291 = vmatprep.subr.bf16.mxu0 %v230
    %292 = vmatpush1.bf16.msra.mxu0 %v229
    %293 = vmatprep.subr.bf16.mxu0 %v234
    %294 = vmatpush1.bf16.msra.mxu0 %v233
    %295 = vmatprep.subr.bf16.mxu0 %v238
    %296 = vmatpush1.bf16.msra.mxu0 %v237
    %297 = vmatprep.subr.bf16.mxu0 %v242
    %298 = vmatpush1.bf16.msra.mxu0 %v241
    %299 = vmatprep.subr.bf16.mxu0 %v246
    %300 = vmatpush1.bf16.msra.mxu0 %v245
    %301 = vmatprep.subr.bf16.mxu0 %v250
    %302 = vmatpush1.bf16.msra.mxu0 %v249
    %303 = vmatprep.subr.bf16.mxu0 %v254
    %304 = vmatpush1.bf16.msra.mxu0 %v253
    %305 = vmatprep.subr.bf16.mxu0 0
    %306 = vmatpush1.bf16.msra.mxu0 0
    %307 = vmatprep.subr.bf16.mxu0 0
    %308 = vmatpush1.bf16.msra.mxu0 0
    %309 = vmatprep.subr.bf16.mxu0 0
    %310 = vmatpush1.bf16.msra.mxu0 0
    %311 = vmatprep.subr.bf16.mxu0 0
    %312 = vmatpush1.bf16.msra.mxu0 0
    %313 = vmatprep.subr.bf16.mxu0 0
    %314 = vmatpush1.bf16.msra.mxu0 0
    %315 = vmatprep.subr.bf16.mxu0 0
    %316 = vmatpush1.bf16.msra.mxu0 0
    %317 = vmatprep.subr.bf16.mxu0 0
    %318 = vmatpush1.bf16.msra.mxu0 0
    %319 = vmatprep.subr.bf16.mxu0 0
    %320 = vmatpush1.bf16.msra.mxu0 0
    %321 = vmatprep.mubr.bf16.mxu0 0
    %322 = vmatmul.mubr.bf16.gmra.mrb[0].mxu0 %v74
    %v323 = vpop.f32.mrb[0].mxu0
    %v324 = vadd.f32 %v112, %v323
    %v325 = vpop.f32.mrb[0].mxu0
    %v326 = vadd.f32 %v116, %v325
    %v327 = vpop.f32.mrb[0].mxu0
    %v328 = vpop.f32.mrb[0].mxu0
    %329 = vdwg.mxu0
    %330 = vmatprep.subr.bf16.mxu0 %v228
    %331 = vmatpush1.bf16.msra.mxu0 %v227
    %332 = vmatprep.subr.bf16.mxu0 %v232
    %333 = vmatpush1.bf16.msra.mxu0 %v231
    %334 = vmatprep.subr.bf16.mxu0 %v236
    %335 = vmatpush1.bf16.msra.mxu0 %v235
    %336 = vmatprep.subr.bf16.mxu0 %v240
    %337 = vmatpush1.bf16.msra.mxu0 %v239
    %338 = vmatprep.subr.bf16.mxu0 %v244
    %339 = vmatpush1.bf16.msra.mxu0 %v243
    %340 = vmatprep.subr.bf16.mxu0 %v248
    %341 = vmatpush1.bf16.msra.mxu0 %v247
    %342 = vmatprep.subr.bf16.mxu0 %v252
    %343 = vmatpush1.bf16.msra.mxu0 %v251
    %344 = vmatprep.subr.bf16.mxu0 %v256
    %345 = vmatpush1.bf16.msra.mxu0 %v255
    %346 = vmatprep.subr.bf16.mxu0 0
    %347 = vmatpush1.bf16.msra.mxu0 0
    %348 = vmatprep.subr.bf16.mxu0 0
    %349 = vmatpush1.bf16.msra.mxu0 0
    %350 = vmatprep.subr.bf16.mxu0 0
    %351 = vmatpush1.bf16.msra.mxu0 0
    %352 = vmatprep.subr.bf16.mxu0 0
    %353 = vmatpush1.bf16.msra.mxu0 0
    %354 = vmatprep.subr.bf16.mxu0 0
    %355 = vmatpush1.bf16.msra.mxu0 0
    %356 = vmatprep.subr.bf16.mxu0 0
    %357 = vmatpush1.bf16.msra.mxu0 0
    %358 = vmatprep.subr.bf16.mxu0 0
    %359 = vmatpush1.bf16.msra.mxu0 0
    %360 = vmatprep.subr.bf16.mxu0 0
    %361 = vmatpush1.bf16.msra.mxu0 0
    %362 = vmatprep.mubr.bf16.mxu0 0
    %363 = vmatmul.mubr.bf16.gmra.mrb[0].mxu0 %v74
    %v364 = vpop.f32.mrb[0].mxu0
    %v365 = vadd.f32 %v120, %v364
    %v366 = vpop.f32.mrb[0].mxu0
    %v367 = vadd.f32 %v124, %v366
    %v368 = vpop.f32.mrb[0].mxu0
    %v369 = vpop.f32.mrb[0].mxu0
    %370 = vdwg.mxu0
    %v371 = vmax.f32 %v324, 0.0
    %v372 = vmax.f32 %v326, 0.0
    %v373 = vmax.f32 %v365, 0.0
    %v374 = vmax.f32 %v367, 0.0
    %v375 = vpack.c.bf16 %v371, %v371
    %v376 = vpack.c.bf16 %v372, %v372
    %v377 = vpack.c.bf16 %v373, %v373
    %v378 = vpack.c.bf16 %v374, %v374
    %v379 = vld [vmem:[#allocation4] sm:$0xff]
    %v380 = vld [vmem:[#allocation4 + $0x8] sm:$0xff]
    %v381 = vld [vmem:[#allocation4 + $0x10] sm:$0xff]
    %v382 = vld [vmem:[#allocation4 + $0x18] sm:$0xff]
    %v383 = vld [vmem:[#allocation4 + $0x20] sm:$0xff]
    %v384 = vld [vmem:[#allocation4 + $0x28] sm:$0xff]
    %v385 = vld [vmem:[#allocation4 + $0x30] sm:$0xff]
    %v386 = vld [vmem:[#allocation4 + $0x38] sm:$0xff]
    %v387 = vld [vmem:[#allocation4 + $0x40] sm:$0xff]
    %v388 = vld [vmem:[#allocation4 + $0x48] sm:$0xff]
    %v389 = vld [vmem:[#allocation4 + $0x50] sm:$0xff]
    %v390 = vld [vmem:[#allocation4 + $0x58] sm:$0xff]
    %v391 = vld [vmem:[#allocation4 + $0x60] sm:$0xff]
    %v392 = vld [vmem:[#allocation4 + $0x68] sm:$0xff]
    %v393 = vld [vmem:[#allocation4 + $0x70] sm:$0xff]
    %v394 = vld [vmem:[#allocation4 + $0x78] sm:$0xff]
    %v395 = vld [vmem:[#allocation4 + $0x80] sm:$0xff]
    %v396 = vld [vmem:[#allocation4 + $0x88] sm:$0xff]
    %v397 = vld [vmem:[#allocation4 + $0x90] sm:$0xff]
    %v398 = vld [vmem:[#allocation4 + $0x98] sm:$0xff]
    %v399 = vld [vmem:[#allocation4 + $0xa0] sm:$0xff]
    %v400 = vld [vmem:[#allocation4 + $0xa8] sm:$0xff]
    %v401 = vld [vmem:[#allocation4 + $0xb0] sm:$0xff]
    %v402 = vld [vmem:[#allocation4 + $0xb8] sm:$0xff]
    %v403 = vld [vmem:[#allocation4 + $0xc0] sm:$0xff]
    %v404 = vld [vmem:[#allocation4 + $0xc8] sm:$0xff]
    %v405 = vld [vmem:[#allocation4 + $0xd0] sm:$0xff]
    %v406 = vld [vmem:[#allocation4 + $0xd8] sm:$0xff]
    %v407 = vld [vmem:[#allocation4 + $0xe0] sm:$0xff]
    %v408 = vld [vmem:[#allocation4 + $0xe8] sm:$0xff]
    %v409 = vld [vmem:[#allocation4 + $0xf0] sm:$0xff]
    %v410 = vld [vmem:[#allocation4 + $0xf8] sm:$0xff]
    %v411 = vld [vmem:[%s4] sm:$0x3]
    %v413 = vlaneseq
    %v414 = vshrl.u32 %v413, 7
    %v415 = vsub.s32 0, %v414
    %v416 = vrot.slane %v411, %v415
    %v417 = vlaneseq
    %v418 = vshrl.u32 %v417, 7
    %v419 = vsub.s32 1, %v418
    %v420 = vrot.slane %v411, %v419
    %v455 = vunpack.c.l.b16 %v379
    %v456 = vunpack.c.h.b16 %v379
    %v457 = vunpack.c.l.b16 %v380
    %v458 = vunpack.c.h.b16 %v380
    %v459 = vunpack.c.l.b16 %v381
    %v460 = vunpack.c.h.b16 %v381
    %v461 = vunpack.c.l.b16 %v382
    %v462 = vunpack.c.h.b16 %v382
    %v463 = vunpack.c.l.b16 %v383
    %v464 = vunpack.c.h.b16 %v383
    %v465 = vunpack.c.l.b16 %v384
    %v466 = vunpack.c.h.b16 %v384
    %v467 = vunpack.c.l.b16 %v385
    %v468 = vunpack.c.h.b16 %v385
    %v469 = vunpack.c.l.b16 %v386
    %v470 = vunpack.c.h.b16 %v386
    %v471 = vunpack.c.l.b16 %v387
    %v472 = vunpack.c.h.b16 %v387
    %v473 = vunpack.c.l.b16 %v388
    %v474 = vunpack.c.h.b16 %v388
    %v475 = vunpack.c.l.b16 %v389
    %v476 = vunpack.c.h.b16 %v389
    %v477 = vunpack.c.l.b16 %v390
    %v478 = vunpack.c.h.b16 %v390
    %v479 = vunpack.c.l.b16 %v391
    %v480 = vunpack.c.h.b16 %v391
    %v481 = vunpack.c.l.b16 %v392
    %v482 = vunpack.c.h.b16 %v392
    %v483 = vunpack.c.l.b16 %v393
    %v484 = vunpack.c.h.b16 %v393
    %v485 = vunpack.c.l.b16 %v394
    %v486 = vunpack.c.h.b16 %v394
    %v487 = vunpack.c.l.b16 %v395
    %v488 = vunpack.c.h.b16 %v395
    %v489 = vunpack.c.l.b16 %v396
    %v490 = vunpack.c.h.b16 %v396
    %v491 = vunpack.c.l.b16 %v397
    %v492 = vunpack.c.h.b16 %v397
    %v493 = vunpack.c.l.b16 %v398
    %v494 = vunpack.c.h.b16 %v398
    %v495 = vunpack.c.l.b16 %v399
    %v496 = vunpack.c.h.b16 %v399
    %v497 = vunpack.c.l.b16 %v400
    %v498 = vunpack.c.h.b16 %v400
    %v499 = vunpack.c.l.b16 %v401
    %v500 = vunpack.c.h.b16 %v401
    %v501 = vunpack.c.l.b16 %v402
    %v502 = vunpack.c.h.b16 %v402
    %v503 = vunpack.c.l.b16 %v403
    %v504 = vunpack.c.h.b16 %v403
    %v505 = vunpack.c.l.b16 %v404
    %v506 = vunpack.c.h.b16 %v404
    %v507 = vunpack.c.l.b16 %v405
    %v508 = vunpack.c.h.b16 %v405
    %v509 = vunpack.c.l.b16 %v406
    %v510 = vunpack.c.h.b16 %v406
    %v511 = vunpack.c.l.b16 %v407
    %v512 = vunpack.c.h.b16 %v407
    %v513 = vunpack.c.l.b16 %v408
    %v514 = vunpack.c.h.b16 %v408
    %v515 = vunpack.c.l.b16 %v409
    %v516 = vunpack.c.h.b16 %v409
    %v517 = vunpack.c.l.b16 %v410
    %v518 = vunpack.c.h.b16 %v410
    %v519 = vpack.c.b16 %v457, %v455
    %v520 = vpack.c.b16 %v458, %v456
    %v521 = vpack.c.b16 %v461, %v459
    %v522 = vpack.c.b16 %v462, %v460
    %v523 = vpack.c.b16 %v465, %v463
    %v524 = vpack.c.b16 %v466, %v464
    %v525 = vpack.c.b16 %v469, %v467
    %v526 = vpack.c.b16 %v470, %v468
    %v527 = vpack.c.b16 %v473, %v471
    %v528 = vpack.c.b16 %v474, %v472
    %v529 = vpack.c.b16 %v477, %v475
    %v530 = vpack.c.b16 %v478, %v476
    %v531 = vpack.c.b16 %v481, %v479
    %v532 = vpack.c.b16 %v482, %v480
    %v533 = vpack.c.b16 %v485, %v483
    %v534 = vpack.c.b16 %v486, %v484
    %v535 = vpack.c.b16 %v489, %v487
    %v536 = vpack.c.b16 %v490, %v488
    %v537 = vpack.c.b16 %v493, %v491
    %v538 = vpack.c.b16 %v494, %v492
    %v539 = vpack.c.b16 %v497, %v495
    %v540 = vpack.c.b16 %v498, %v496
    %v541 = vpack.c.b16 %v501, %v499
    %v542 = vpack.c.b16 %v502, %v500
    %v543 = vpack.c.b16 %v505, %v503
    %v544 = vpack.c.b16 %v506, %v504
    %v545 = vpack.c.b16 %v509, %v507
    %v546 = vpack.c.b16 %v510, %v508
    %v547 = vpack.c.b16 %v513, %v511
    %v548 = vpack.c.b16 %v514, %v512
    %v549 = vpack.c.b16 %v517, %v515
    %v550 = vpack.c.b16 %v518, %v516
    %583 = vmatprep.subr.bf16.mxu0 %v520
    %584 = vmatpush1.bf16.msra.mxu0 %v519
    %585 = vmatprep.subr.bf16.mxu0 %v522
    %586 = vmatpush1.bf16.msra.mxu0 %v521
    %587 = vmatprep.subr.bf16.mxu0 %v524
    %588 = vmatpush1.bf16.msra.mxu0 %v523
    %589 = vmatprep.subr.bf16.mxu0 %v526
    %590 = vmatpush1.bf16.msra.mxu0 %v525
    %591 = vmatprep.subr.bf16.mxu0 %v528
    %592 = vmatpush1.bf16.msra.mxu0 %v527
    %593 = vmatprep.subr.bf16.mxu0 %v530
    %594 = vmatpush1.bf16.msra.mxu0 %v529
    %595 = vmatprep.subr.bf16.mxu0 %v532
    %596 = vmatpush1.bf16.msra.mxu0 %v531
    %597 = vmatprep.subr.bf16.mxu0 %v534
    %598 = vmatpush1.bf16.msra.mxu0 %v533
    %599 = vmatprep.subr.bf16.mxu0 %v536
    %600 = vmatpush1.bf16.msra.mxu0 %v535
    %601 = vmatprep.subr.bf16.mxu0 %v538
    %602 = vmatpush1.bf16.msra.mxu0 %v537
    %603 = vmatprep.subr.bf16.mxu0 %v540
    %604 = vmatpush1.bf16.msra.mxu0 %v539
    %605 = vmatprep.subr.bf16.mxu0 %v542
    %606 = vmatpush1.bf16.msra.mxu0 %v541
    %607 = vmatprep.subr.bf16.mxu0 %v544
    %608 = vmatpush1.bf16.msra.mxu0 %v543
    %609 = vmatprep.subr.bf16.mxu0 %v546
    %610 = vmatpush1.bf16.msra.mxu0 %v545
    %611 = vmatprep.subr.bf16.mxu0 %v548
    %612 = vmatpush1.bf16.msra.mxu0 %v547
    %613 = vmatprep.subr.bf16.mxu0 %v550
    %614 = vmatpush1.bf16.msra.mxu0 %v549
    %615 = vmatprep.mubr.bf16.mxu0 %v376
    %616 = vmatmul.mubr.bf16.gmra.mrb[0].mxu0 %v375
    %v617 = vpop.f32.mrb[0].mxu0
    %v618 = vadd.f32 %v416, %v617
    %v619 = vpop.f32.mrb[0].mxu0
    %v620 = vadd.f32 %v420, %v619
    %v621 = vpop.f32.mrb[0].mxu0
    %v622 = vpop.f32.mrb[0].mxu0
    %623 = vdwg.mxu0
    %v624 = vmax.f32 %v618, 0.0
    %v625 = vmax.f32 %v620, 0.0
    %v626 = vld [vmem:[#allocation6] sm:$0xff]
    %v627 = vld [vmem:[#allocation6 + $0x8] sm:$0xff]
    %v628 = vld [vmem:[#allocation6 + $0x10] sm:$0xff]
    %v629 = vld [vmem:[#allocation6 + $0x18] sm:$0xff]
    %v630 = vld [vmem:[#allocation6 + $0x20] sm:$0xff]
    %v631 = vld [vmem:[#allocation6 + $0x28] sm:$0xff]
    %v632 = vld [vmem:[#allocation6 + $0x30] sm:$0xff]
    %v633 = vld [vmem:[#allocation6 + $0x38] sm:$0xff]
    %v634 = vld [vmem:[#allocation6 + $0x40] sm:$0xff]
    %v635 = vld [vmem:[#allocation6 + $0x48] sm:$0xff]
    %v636 = vld [vmem:[#allocation6 + $0x50] sm:$0xff]
    %v637 = vld [vmem:[#allocation6 + $0x58] sm:$0xff]
    %v638 = vld [vmem:[#allocation6 + $0x60] sm:$0xff]
    %v639 = vld [vmem:[#allocation6 + $0x68] sm:$0xff]
    %v640 = vld [vmem:[#allocation6 + $0x70] sm:$0xff]
    %v641 = vld [vmem:[#allocation6 + $0x78] sm:$0xff]
    %v642 = vld [vmem:[#allocation6 + $0x80] sm:$0xff]
    %v643 = vld [vmem:[#allocation6 + $0x88] sm:$0xff]
    %v644 = vld [vmem:[#allocation6 + $0x90] sm:$0xff]
    %v645 = vld [vmem:[#allocation6 + $0x98] sm:$0xff]
    %v646 = vld [vmem:[#allocation6 + $0xa0] sm:$0xff]
    %v647 = vld [vmem:[#allocation6 + $0xa8] sm:$0xff]
    %v648 = vld [vmem:[#allocation6 + $0xb0] sm:$0xff]
    %v649 = vld [vmem:[#allocation6 + $0xb8] sm:$0xff]
    %v650 = vld [vmem:[#allocation6 + $0xc0] sm:$0xff]
    %v651 = vld [vmem:[#allocation6 + $0xc8] sm:$0xff]
    %v652 = vld [vmem:[#allocation6 + $0xd0] sm:$0xff]
    %v653 = vld [vmem:[#allocation6 + $0xd8] sm:$0xff]
    %v654 = vld [vmem:[#allocation6 + $0xe0] sm:$0xff]
    %v655 = vld [vmem:[#allocation6 + $0xe8] sm:$0xff]
    %v656 = vld [vmem:[#allocation6 + $0xf0] sm:$0xff]
    %v657 = vld [vmem:[#allocation6 + $0xf8] sm:$0xff]
    %v658 = vld [vmem:[%s6] sm:$0x3]
    %v660 = vlaneseq
    %v661 = vshrl.u32 %v660, 7
    %v662 = vsub.s32 0, %v661
    %v663 = vrot.slane %v658, %v662
    %v664 = vlaneseq
    %v665 = vshrl.u32 %v664, 7
    %v666 = vsub.s32 1, %v665
    %v667 = vrot.slane %v658, %v666
    %v702 = vunpack.c.l.b16 %v626
    %v703 = vunpack.c.h.b16 %v626
    %v704 = vunpack.c.l.b16 %v627
    %v705 = vunpack.c.h.b16 %v627
    %v706 = vunpack.c.l.b16 %v628
    %v707 = vunpack.c.h.b16 %v628
    %v708 = vunpack.c.l.b16 %v629
    %v709 = vunpack.c.h.b16 %v629
    %v710 = vunpack.c.l.b16 %v630
    %v711 = vunpack.c.h.b16 %v630
    %v712 = vunpack.c.l.b16 %v631
    %v713 = vunpack.c.h.b16 %v631
    %v714 = vunpack.c.l.b16 %v632
    %v715 = vunpack.c.h.b16 %v632
    %v716 = vunpack.c.l.b16 %v633
    %v717 = vunpack.c.h.b16 %v633
    %v718 = vunpack.c.l.b16 %v634
    %v719 = vunpack.c.h.b16 %v634
    %v720 = vunpack.c.l.b16 %v635
    %v721 = vunpack.c.h.b16 %v635
    %v722 = vunpack.c.l.b16 %v636
    %v723 = vunpack.c.h.b16 %v636
    %v724 = vunpack.c.l.b16 %v637
    %v725 = vunpack.c.h.b16 %v637
    %v726 = vunpack.c.l.b16 %v638
    %v727 = vunpack.c.h.b16 %v638
    %v728 = vunpack.c.l.b16 %v639
    %v729 = vunpack.c.h.b16 %v639
    %v730 = vunpack.c.l.b16 %v640
    %v731 = vunpack.c.h.b16 %v640
    %v732 = vunpack.c.l.b16 %v641
    %v733 = vunpack.c.h.b16 %v641
    %v734 = vunpack.c.l.b16 %v642
    %v735 = vunpack.c.h.b16 %v642
    %v736 = vunpack.c.l.b16 %v643
    %v737 = vunpack.c.h.b16 %v643
    %v738 = vunpack.c.l.b16 %v644
    %v739 = vunpack.c.h.b16 %v644
    %v740 = vunpack.c.l.b16 %v645
    %v741 = vunpack.c.h.b16 %v645
    %v742 = vunpack.c.l.b16 %v646
    %v743 = vunpack.c.h.b16 %v646
    %v744 = vunpack.c.l.b16 %v647
    %v745 = vunpack.c.h.b16 %v647
    %v746 = vunpack.c.l.b16 %v648
    %v747 = vunpack.c.h.b16 %v648
    %v748 = vunpack.c.l.b16 %v649
    %v749 = vunpack.c.h.b16 %v649
    %v750 = vunpack.c.l.b16 %v650
    %v751 = vunpack.c.h.b16 %v650
    %v752 = vunpack.c.l.b16 %v651
    %v753 = vunpack.c.h.b16 %v651
    %v754 = vunpack.c.l.b16 %v652
    %v755 = vunpack.c.h.b16 %v652
    %v756 = vunpack.c.l.b16 %v653
    %v757 = vunpack.c.h.b16 %v653
    %v758 = vunpack.c.l.b16 %v654
    %v759 = vunpack.c.h.b16 %v654
    %v760 = vunpack.c.l.b16 %v655
    %v761 = vunpack.c.h.b16 %v655
    %v762 = vunpack.c.l.b16 %v656
    %v763 = vunpack.c.h.b16 %v656
    %v764 = vunpack.c.l.b16 %v657
    %v765 = vunpack.c.h.b16 %v657
    %v766 = vpack.c.b16 %v704, %v702
    %v767 = vpack.c.b16 %v705, %v703
    %v768 = vpack.c.b16 %v708, %v706
    %v769 = vpack.c.b16 %v709, %v707
    %v770 = vpack.c.b16 %v712, %v710
    %v771 = vpack.c.b16 %v713, %v711
    %v772 = vpack.c.b16 %v716, %v714
    %v773 = vpack.c.b16 %v717, %v715
    %v774 = vpack.c.b16 %v720, %v718
    %v775 = vpack.c.b16 %v721, %v719
    %v776 = vpack.c.b16 %v724, %v722
    %v777 = vpack.c.b16 %v725, %v723
    %v778 = vpack.c.b16 %v728, %v726
    %v779 = vpack.c.b16 %v729, %v727
    %v780 = vpack.c.b16 %v732, %v730
    %v781 = vpack.c.b16 %v733, %v731
    %v782 = vpack.c.b16 %v736, %v734
    %v783 = vpack.c.b16 %v737, %v735
    %v784 = vpack.c.b16 %v740, %v738
    %v785 = vpack.c.b16 %v741, %v739
    %v786 = vpack.c.b16 %v744, %v742
    %v787 = vpack.c.b16 %v745, %v743
    %v788 = vpack.c.b16 %v748, %v746
    %v789 = vpack.c.b16 %v749, %v747
    %v790 = vpack.c.b16 %v752, %v750
    %v791 = vpack.c.b16 %v753, %v751
    %v792 = vpack.c.b16 %v756, %v754
    %v793 = vpack.c.b16 %v757, %v755
    %v794 = vpack.c.b16 %v760, %v758
    %v795 = vpack.c.b16 %v761, %v759
    %v796 = vpack.c.b16 %v764, %v762
    %v797 = vpack.c.b16 %v765, %v763
    %830 = vmatprep.subr.bf16.mxu0 %v767
    %831 = vmatpush1.bf16.msra.mxu0 %v766
    %832 = vmatprep.subr.bf16.mxu0 %v769
    %833 = vmatpush1.bf16.msra.mxu0 %v768
    %834 = vmatprep.subr.bf16.mxu0 %v771
    %835 = vmatpush1.bf16.msra.mxu0 %v770
    %836 = vmatprep.subr.bf16.mxu0 %v773
    %837 = vmatpush1.bf16.msra.mxu0 %v772
    %838 = vmatprep.subr.bf16.mxu0 %v775
    %839 = vmatpush1.bf16.msra.mxu0 %v774
    %840 = vmatprep.subr.bf16.mxu0 %v777
    %841 = vmatpush1.bf16.msra.mxu0 %v776
    %842 = vmatprep.subr.bf16.mxu0 %v779
    %843 = vmatpush1.bf16.msra.mxu0 %v778
    %844 = vmatprep.subr.bf16.mxu0 %v781
    %845 = vmatpush1.bf16.msra.mxu0 %v780
    %846 = vmatprep.subr.bf16.mxu0 %v783
    %847 = vmatpush1.bf16.msra.mxu0 %v782
    %848 = vmatprep.subr.bf16.mxu0 %v785
    %849 = vmatpush1.bf16.msra.mxu0 %v784
    %850 = vmatprep.subr.bf16.mxu0 %v787
    %851 = vmatpush1.bf16.msra.mxu0 %v786
    %852 = vmatprep.subr.bf16.mxu0 %v789
    %853 = vmatpush1.bf16.msra.mxu0 %v788
    %854 = vmatprep.subr.bf16.mxu0 %v791
    %855 = vmatpush1.bf16.msra.mxu0 %v790
    %856 = vmatprep.subr.bf16.mxu0 %v793
    %857 = vmatpush1.bf16.msra.mxu0 %v792
    %858 = vmatprep.subr.bf16.mxu0 %v795
    %859 = vmatpush1.bf16.msra.mxu0 %v794
    %860 = vmatprep.subr.bf16.mxu0 %v797
    %861 = vmatpush1.bf16.msra.mxu0 %v796
    %862 = vmatprep.mubr.bf16.mxu0 %v378
    %863 = vmatmul.mubr.bf16.gmra.mrb[0].mxu0 %v377
    %v864 = vpop.f32.mrb[0].mxu0
    %v865 = vadd.f32 %v663, %v864
    %v866 = vpop.f32.mrb[0].mxu0
    %v867 = vadd.f32 %v667, %v866
    %v868 = vpop.f32.mrb[0].mxu0
    %v869 = vpop.f32.mrb[0].mxu0
    %870 = vdwg.mxu0
    %v871 = vmax.f32 %v865, 0.0
    %v872 = vmax.f32 %v867, 0.0
    %v873 = vpack.c.bf16 %v624, %v624
    %v874 = vpack.c.bf16 %v625, %v625
    %v875 = vpack.c.bf16 %v871, %v871
    %v876 = vpack.c.bf16 %v872, %v872
    %v877 = vld [vmem:[%s7] sm:$0xf]
    %v878 = vld [vmem:[%s8] sm:$0x3]
    %880 = vset.pattern.permute.xlu0 0
    %881 = vperm.xlu0 %880, %v878
    %v882 = vpop.permute.xlu0 %881
    %v886 = vunpack.c.l.s4 1966171168
    %v887 = vunpack.c.0.s8 %v886
    %v888 = vlaneseq
    %v889 = vshrl.u32 %v888, 7
    %v890 = vsub.s32 %v887, %v889
    %v891 = vrot.slane %v877, %v890
    %v892 = vcombine.high %v891, %v891
    %v894 = vunpack.c.l.s4 1966171168
    %v895 = vunpack.c.0.s8 %v894
    %v896 = vlaneseq
    %v897 = vshrl.u32 %v896, 7
    %v898 = vsub.s32 %v895, %v897
    %v899 = vrot.slane %v891, %v898
    %v901 = vunpack.c.l.s4 1966171168
    %v902 = vunpack.c.0.s8 %v901
    %v903 = vlaneseq
    %v904 = vshrl.u32 %v903, 7
    %v905 = vsub.s32 %v902, %v904
    %v906 = vrot.slane %v892, %v905
    %v907 = vcombine.high %v899, %v899
    %v908 = vcombine.high %v906, %v906
    %913 = vmatprep.subr.bf16.mxu0 %v874
    %914 = vmatpush1.bf16.xpose.msra.mxu0 %v873
    %915 = vmatprep.subr.bf16.mxu0 0
    %916 = vmatpush1.bf16.xpose.msra.mxu0 0
    %917 = vmatprep.subr.bf16.mxu0 0
    %918 = vmatpush1.bf16.xpose.msra.mxu0 0
    %919 = vmatprep.subr.bf16.mxu0 0
    %920 = vmatpush1.bf16.xpose.msra.mxu0 0
    %921 = vmatprep.subr.bf16.mxu0 0
    %922 = vmatpush1.bf16.xpose.msra.mxu0 0
    %923 = vmatprep.subr.bf16.mxu0 0
    %924 = vmatpush1.bf16.xpose.msra.mxu0 0
    %925 = vmatprep.subr.bf16.mxu0 0
    %926 = vmatpush1.bf16.xpose.msra.mxu0 0
    %927 = vmatprep.subr.bf16.mxu0 0
    %928 = vmatpush1.bf16.xpose.msra.mxu0 0
    %929 = vmatprep.subr.bf16.mxu0 0
    %930 = vmatpush1.bf16.xpose.msra.mxu0 0
    %931 = vmatprep.subr.bf16.mxu0 0
    %932 = vmatpush1.bf16.xpose.msra.mxu0 0
    %933 = vmatprep.subr.bf16.mxu0 0
    %934 = vmatpush1.bf16.xpose.msra.mxu0 0
    %935 = vmatprep.subr.bf16.mxu0 0
    %936 = vmatpush1.bf16.xpose.msra.mxu0 0
    %937 = vmatprep.subr.bf16.mxu0 0
    %938 = vmatpush1.bf16.xpose.msra.mxu0 0
    %939 = vmatprep.subr.bf16.mxu0 0
    %940 = vmatpush1.bf16.xpose.msra.mxu0 0
    %941 = vmatprep.subr.bf16.mxu0 0
    %942 = vmatpush1.bf16.xpose.msra.mxu0 0
    %943 = vmatprep.subr.bf16.mxu0 0
    %944 = vmatpush1.bf16.xpose.msra.mxu0 0
    %945 = vmatprep.mubr.bf16.mxu0 %v906
    %946 = vmatmul.mubr.bf16.gmra.mrb[0].mxu0 %v899
    %v947 = vpop.f32.mrb[0].mxu0
    %v948 = vadd.f32 %v882, %v947
    %v949 = vpop.f32.mrb[0].mxu0
    %v950 = vpop.f32.mrb[0].mxu0
    %v951 = vpop.f32.mrb[0].mxu0
    %952 = vdwg.mxu0
    %953 = vmatprep.subr.bf16.mxu0 %v876
    %954 = vmatpush1.bf16.xpose.msra.mxu0 %v875
    %955 = vmatprep.subr.bf16.mxu0 0
    %956 = vmatpush1.bf16.xpose.msra.mxu0 0
    %957 = vmatprep.subr.bf16.mxu0 0
    %958 = vmatpush1.bf16.xpose.msra.mxu0 0
    %959 = vmatprep.subr.bf16.mxu0 0
    %960 = vmatpush1.bf16.xpose.msra.mxu0 0
    %961 = vmatprep.subr.bf16.mxu0 0
    %962 = vmatpush1.bf16.xpose.msra.mxu0 0
    %963 = vmatprep.subr.bf16.mxu0 0
    %964 = vmatpush1.bf16.xpose.msra.mxu0 0
    %965 = vmatprep.subr.bf16.mxu0 0
    %966 = vmatpush1.bf16.xpose.msra.mxu0 0
    %967 = vmatprep.subr.bf16.mxu0 0
    %968 = vmatpush1.bf16.xpose.msra.mxu0 0
    %969 = vmatprep.subr.bf16.mxu0 0
    %970 = vmatpush1.bf16.xpose.msra.mxu0 0
    %971 = vmatprep.subr.bf16.mxu0 0
    %972 = vmatpush1.bf16.xpose.msra.mxu0 0
    %973 = vmatprep.subr.bf16.mxu0 0
    %974 = vmatpush1.bf16.xpose.msra.mxu0 0
    %975 = vmatprep.subr.bf16.mxu0 0
    %976 = vmatpush1.bf16.xpose.msra.mxu0 0
    %977 = vmatprep.subr.bf16.mxu0 0
    %978 = vmatpush1.bf16.xpose.msra.mxu0 0
    %979 = vmatprep.subr.bf16.mxu0 0
    %980 = vmatpush1.bf16.xpose.msra.mxu0 0
    %981 = vmatprep.subr.bf16.mxu0 0
    %982 = vmatpush1.bf16.xpose.msra.mxu0 0
    %983 = vmatprep.subr.bf16.mxu0 0
    %984 = vmatpush1.bf16.xpose.msra.mxu0 0
    %985 = vmatprep.mubr.bf16.mxu0 %v908
    %986 = vmatmul.mubr.bf16.gmra.mrb[0].mxu0 %v907
    %v987 = vpop.f32.mrb[0].mxu0
    %v988 = vadd.f32 %v948, %v987
    %v989 = vpop.f32.mrb[0].mxu0
    %v990 = vpop.f32.mrb[0].mxu0
    %v991 = vpop.f32.mrb[0].mxu0
    %992 = vdwg.mxu0
    %vm993 = vcmask 58368
    %994 = vst.msk [vmem:[%s9] sm:$0x3] %vm993, %v988
    // Predicated region
    $region50: #{critic_forward.1} parent=1 // pred_check
      _
    $region51: #{critic_forward.1} parent=1 // pred_check_branch
      %996 = sbr.rel (0) target = $region53
    $region52: #{critic_forward.1} parent=1 // pred_region
      _
    $region53: #{critic_forward.1} parent=1 // pred_fallthru
      _
    // Predicated region
    $region54: #{critic_forward.1} parent=1 // pred_check
      _
    $region55: #{critic_forward.1} parent=1 // pred_check_branch
      %998 = sbr.rel (0) target = $region57
    $region56: #{critic_forward.1} parent=1 // pred_region
      _
    $region57: #{critic_forward.1} parent=1 // pred_fallthru
      _
    %999 = vsyncpa [#allocation3], 1
    %1000 = vsyncpa [#allocation5], 1

</llo_original>
